<compile_context>
chip_gen: v7x
topology: tpu7x:2x2x1
jax: 0.10.0
libtpu: 0.0.40
codegen_flags: <defaults>
</compile_context>

<pallas_src>
import jax
import jax.numpy as jnp
from jax.experimental import pallas as pl
from jax.experimental.pallas import tpu as pltpu


def _round_up(x, m):
    return ((x + m - 1) // m) * m


def make_actor_kernel(act_dim, half, act_limit):
    # act_limit is a trace-time constant (fixed per environment); pass it as an
    # SMEM scalar instead if several distinct limits are used in one process.
    def kernel(obs_ref, w1_ref, b1_ref, wh_ref, bh_ref, eps_ref, act_ref):
        x = obs_ref[...]                                    # [tm, obs_dim]
        # fc1 + ReLU (MXU, f32 accumulate; bias/ReLU on the VPU in f32)
        h = jnp.dot(x, w1_ref[...], preferred_element_type=jnp.float32)
        h = jnp.maximum(h + b1_ref[...], 0.0)               # [tm, hidden] f32
        # fused mu|std head: ONE lane-dense matmul -> [tm, 2*half]
        head = jnp.dot(h.astype(wh_ref.dtype), wh_ref[...],
                       preferred_element_type=jnp.float32)
        head = head + bh_ref[...]
        mu = head[:, :act_dim]                               # [tm, act_dim]
        s = head[:, half:half + act_dim]
        # numerically stable softplus (exp/log1p run on the EUP slot)
        std = jnp.log1p(jnp.exp(-jnp.abs(s))) + jnp.maximum(s, 0.0)
        # reparameterized sample -> tanh squash -> scale (natural-width store)
        act_ref[...] = (jnp.tanh(mu + std * eps_ref[...]) * act_limit
                        ).astype(act_ref.dtype)
    return kernel


def pack_actor_params(params, param_dtype=jnp.float32):
    """One-time packing: call once per parameter update, NOT per forward.

    Packs fc_mu / fc_std into a single lane-dense head of width 2*half
    (half = ceil(act_dim/64)*64, i.e. 128 lanes when act_dim <= 64) and casts
    the streamed matmul operands to `param_dtype` (use bf16 on v6e/v7x to
    halve HBM bytes; biases stay f32 for the f32 VPU/EUP epilogue).
    """
    hidden = params["w1"].shape[1]
    act_dim = params["wmu"].shape[1]
    half = _round_up(max(act_dim, 1), 64)

    w_head = jnp.zeros((hidden, 2 * half), jnp.float32)
    w_head = w_head.at[:, :act_dim].set(params["wmu"])
    w_head = w_head.at[:, half:half + act_dim].set(params["wstd"])
    b_head = jnp.zeros((1, 2 * half), jnp.float32)
    b_head = b_head.at[:, :act_dim].set(params["bmu"])
    b_head = b_head.at[:, half:half + act_dim].set(params["bstd"])

    return {
        "w1": params["w1"].astype(param_dtype),
        "b1": params["b1"].astype(jnp.float32),
        "w_head": w_head.astype(param_dtype),
        "b_head": b_head,
    }


def ddpg_forward(obs, packed, eps, act_limit, *, block_b=2048):
    """Pallas TPU implementation of DDPG.forward (== actor(obs)[0])."""
    B, obs_dim = obs.shape
    act_dim = eps.shape[1]
    hidden = packed["w1"].shape[1]
    head_w = packed["w_head"].shape[1]
    half = head_w // 2
    param_dtype = packed["w1"].dtype
    in_itemsize = jnp.dtype(param_dtype).itemsize

    # Batch tile: as large as possible to amortize the ~0.35us per-step
    # overhead, rounded to 8 sublanes, but capped so the grid keeps >= 2 steps
    # (both v7x TensorCores busy; v5e/v6e are single-TC and don't care).
    tm = min(block_b, _round_up(max(pl.cdiv(B, 2), 1), 8))
    tm = max(8, _round_up(tm, 8))
    grid = (pl.cdiv(B, tm),)   # ragged last block: no padded copies needed

    obs_in = obs.astype(param_dtype)   # no-op for f32 params
    eps_in = eps.astype(jnp.float32)

    cost = pl.CostEstimate(
        flops=2 * B * (obs_dim * hidden + hidden * head_w),
        transcendentals=3 * B * act_dim,
        bytes_accessed=(B * obs_dim * in_itemsize          # obs stream
                        + B * act_dim * 4                  # eps stream
                        + B * act_dim * 4                  # action out
                        + obs_dim * hidden * in_itemsize   # W1 (DMA'd once)
                        + hidden * 4                        # b1
                        + hidden * head_w * in_itemsize    # W_head (once)
                        + head_w * 4),                      # b_head
    )

    out = pl.pallas_call(
        make_actor_kernel(act_dim, half, float(act_limit)),
        out_shape=jax.ShapeDtypeStruct((B, act_dim), jnp.float32),
        grid_spec=pltpu.PrefetchScalarGridSpec(
            num_scalar_prefetch=0,
            grid=grid,
            in_specs=[
                pl.BlockSpec((tm, obs_dim), lambda i: (i, 0)),        # obs    (batch-tiled)
                pl.BlockSpec((obs_dim, hidden), lambda i: (0, 0)),    # W1     (resident)
                pl.BlockSpec((1, hidden), lambda i: (0, 0)),          # b1     (resident)
                pl.BlockSpec((hidden, head_w), lambda i: (0, 0)),     # W_head (resident)
                pl.BlockSpec((1, head_w), lambda i: (0, 0)),          # b_head (resident)
                pl.BlockSpec((tm, act_dim), lambda i: (i, 0)),        # eps    (natural width)
            ],
            out_specs=pl.BlockSpec((tm, act_dim), lambda i: (i, 0)),  # action (natural width)
        ),
        compiler_params=pltpu.CompilerParams(
            # batch axis is independent -> shard across the 2 TCs on v7x
            dimension_semantics=("parallel",),
            # generous vs. actual footprint; fine on v5e/v6e (128 MiB phys)
            # and v7x (64 MiB phys, 32 MiB default scoped)
            vmem_limit_bytes=32 * 1024 * 1024,
        ),
        cost_estimate=cost,
    )(obs_in, packed["w1"], packed["b1"], packed["w_head"], packed["b_head"], eps_in)

    return out


def init_params(key, obs_dim, hidden_dim, act_dim):
    """Deterministic init mimicking nn.Linear default (uniform +/- 1/sqrt(fan_in))."""
    ks = jax.random.split(key, 6)

    def linear(kw, kb, fan_in, fan_out):
        bound = 1.0 / jnp.sqrt(fan_in)
        w = jax.random.uniform(kw, (fan_in, fan_out), jnp.float32, -bound, bound)
        b = jax.random.uniform(kb, (1, fan_out), jnp.float32, -bound, bound)
        return w, b

    w1, b1 = linear(ks[0], ks[1], obs_dim, hidden_dim)
    wmu, bmu = linear(ks[2], ks[3], hidden_dim, act_dim)
    wstd, bstd = linear(ks[4], ks[5], hidden_dim, act_dim)
    return {"w1": w1, "b1": b1, "wmu": wmu, "bmu": bmu,
            "wstd": wstd, "bstd": bstd}


if __name__ == "__main__":
    # Small model-config-like constants; with the >=2-grid-step cap, B=20 gives
    # tm=16 and a 2-step grid, exercising the ragged last block, masked output
    # stores, and resident-weight index maps.
    B, OBS_DIM, HIDDEN_DIM, ACT_DIM = 20, 16, 32, 4
    ACT_LIMIT = 2.0

    key = jax.random.PRNGKey(0)
    k_obs, k_eps, k_par = jax.random.split(key, 3)

    obs = jax.random.normal(k_obs, (B, OBS_DIM), dtype=jnp.float32)
    # Deterministic stand-in for Normal.rsample() noise (zeros == eval-mode action)
    eps = jax.random.normal(k_eps, (B, ACT_DIM), dtype=jnp.float32)
    params = init_params(k_par, OBS_DIM, HIDDEN_DIM, ACT_DIM)

    # Pure-JAX reference
    h = jnp.maximum(obs @ params["w1"] + params["b1"], 0.0)
    mu = h @ params["wmu"] + params["bmu"]
    std = jax.nn.softplus(h @ params["wstd"] + params["bstd"])
    ref = jnp.tanh(mu + std * eps) * ACT_LIMIT

    # f32 path: strict check against the reference.
    packed_f32 = pack_actor_params(params, jnp.float32)
    action = jax.block_until_ready(ddpg_forward(obs, packed_f32, eps, ACT_LIMIT))
    assert action.shape == (B, ACT_DIM)
    assert jnp.allclose(action, ref, atol=1e-5, rtol=1e-5)

    # bf16 streamed-operand path (v6e/v7x bandwidth optimization): loose check.
    packed_bf16 = pack_actor_params(params, jnp.bfloat16)
    action_bf16 = jax.block_until_ready(ddpg_forward(obs, packed_bf16, eps, ACT_LIMIT))
    assert action_bf16.shape == (B, ACT_DIM)
    assert bool(jnp.all(jnp.isfinite(action_bf16)))
    assert jnp.allclose(action_bf16, ref, atol=1e-1, rtol=1e-1)

    print("KERNEL_OK")
</pallas_src>

<mosaic_0001>
module attributes {stable_mosaic.version = 11 : i64} {
  func.func @kernel(%arg0: i32, %arg1: memref<16x16xf32, #tpu.memory_space<vmem>>, %arg2: memref<16x32xf32, #tpu.memory_space<vmem>>, %arg3: memref<1x32xf32, #tpu.memory_space<vmem>>, %arg4: memref<32x128xf32, #tpu.memory_space<vmem>>, %arg5: memref<1x128xf32, #tpu.memory_space<vmem>>, %arg6: memref<16x4xf32, #tpu.memory_space<vmem>>, %arg7: memref<16x4xf32, #tpu.memory_space<vmem>>) attributes {dimension_semantics = [#tpu.dimension_semantics<parallel>], iteration_bounds = array<i64: 2>, scalar_prefetch = 0 : i64, scratch_operands = 0 : i64, tpu.core_type = #tpu.core_type<tc>, window_params = [{transform_indices = @transform_0, window_bounds = array<i64: 16, 16>}, {pipeline_mode = #tpu.pipeline_mode<synchronous>, transform_indices = @transform_1, window_bounds = array<i64: 16, 32>}, {pipeline_mode = #tpu.pipeline_mode<synchronous>, transform_indices = @transform_2, window_bounds = array<i64: 1, 32>}, {pipeline_mode = #tpu.pipeline_mode<synchronous>, transform_indices = @transform_3, window_bounds = array<i64: 32, 128>}, {pipeline_mode = #tpu.pipeline_mode<synchronous>, transform_indices = @transform_4, window_bounds = array<i64: 1, 128>}, {transform_indices = @transform_5, window_bounds = array<i64: 16, 4>}, {transform_indices = @transform_6, window_bounds = array<i64: 16, 4>}]} {
    %c0 = arith.constant 0 : index
    %c0_0 = arith.constant 0 : index
    %0 = vector.load %arg1[%c0, %c0_0] : memref<16x16xf32, #tpu.memory_space<vmem>>, vector<16x16xf32>
    %c0_1 = arith.constant 0 : index
    %c0_2 = arith.constant 0 : index
    %1 = vector.load %arg2[%c0_1, %c0_2] : memref<16x32xf32, #tpu.memory_space<vmem>>, vector<16x32xf32>
    %cst = arith.constant dense<0.000000e+00> : vector<16x32xf32>
    %2 = tpu.matmul %0, %1, %cst {dimension_numbers = #tpu.dot_dimension_numbers<[1], [0], [0], [1], [0, 0, 1, 1], [], []>} : vector<16x16xf32>, vector<16x32xf32>, vector<16x32xf32> -> vector<16x32xf32>
    %c0_3 = arith.constant 0 : index
    %c0_4 = arith.constant 0 : index
    %3 = vector.load %arg3[%c0_3, %c0_4] : memref<1x32xf32, #tpu.memory_space<vmem>>, vector<1x32xf32>
    %4 = vector.broadcast %3 : vector<1x32xf32> to vector<16x32xf32>
    %5 = arith.addf %2, %4 : vector<16x32xf32>
    %cst_5 = arith.constant 0.000000e+00 : f32
    %6 = vector.broadcast %cst_5 : f32 to vector<16x32xf32>
    %7 = arith.maximumf %5, %6 : vector<16x32xf32>
    %c0_6 = arith.constant 0 : index
    %c0_7 = arith.constant 0 : index
    %8 = vector.load %arg4[%c0_6, %c0_7] : memref<32x128xf32, #tpu.memory_space<vmem>>, vector<32x128xf32>
    %cst_8 = arith.constant dense<0.000000e+00> : vector<16x128xf32>
    %9 = tpu.matmul %7, %8, %cst_8 {dimension_numbers = #tpu.dot_dimension_numbers<[1], [0], [0], [1], [0, 0, 1, 1], [], []>} : vector<16x32xf32>, vector<32x128xf32>, vector<16x128xf32> -> vector<16x128xf32>
    %c0_9 = arith.constant 0 : index
    %c0_10 = arith.constant 0 : index
    %10 = vector.load %arg5[%c0_9, %c0_10] : memref<1x128xf32, #tpu.memory_space<vmem>>, vector<1x128xf32>
    %11 = vector.broadcast %10 : vector<1x128xf32> to vector<16x128xf32>
    %12 = arith.addf %9, %11 : vector<16x128xf32>
    %13 = vector.extract_strided_slice %12 {offsets = [0, 0], sizes = [16, 4], strides = [1, 1]} : vector<16x128xf32> to vector<16x4xf32>
    %14 = vector.extract_strided_slice %12 {offsets = [0, 64], sizes = [16, 4], strides = [1, 1]} : vector<16x128xf32> to vector<16x4xf32>
    %15 = math.absf %14 : vector<16x4xf32>
    %cst_11 = arith.constant 0.000000e+00 : f32
    %16 = vector.broadcast %cst_11 : f32 to vector<16x4xf32>
    %17 = arith.subf %16, %15 : vector<16x4xf32>
    %18 = math.exp %17 : vector<16x4xf32>
    %19 = math.log1p %18 : vector<16x4xf32>
    %cst_12 = arith.constant 0.000000e+00 : f32
    %20 = vector.broadcast %cst_12 : f32 to vector<16x4xf32>
    %21 = arith.maximumf %14, %20 : vector<16x4xf32>
    %22 = arith.addf %19, %21 : vector<16x4xf32>
    %c0_13 = arith.constant 0 : index
    %c0_14 = arith.constant 0 : index
    %23 = vector.load %arg6[%c0_13, %c0_14] : memref<16x4xf32, #tpu.memory_space<vmem>>, vector<16x4xf32>
    %24 = arith.mulf %22, %23 : vector<16x4xf32>
    %25 = arith.addf %13, %24 : vector<16x4xf32>
    %26 = math.tanh %25 : vector<16x4xf32>
    %cst_15 = arith.constant 2.000000e+00 : f32
    %27 = vector.broadcast %cst_15 : f32 to vector<16x4xf32>
    %28 = arith.mulf %26, %27 : vector<16x4xf32>
    %c0_16 = arith.constant 0 : index
    %c0_17 = arith.constant 0 : index
    %29 = vector.load %arg7[%c0_16, %c0_17] : memref<16x4xf32, #tpu.memory_space<vmem>>, vector<16x4xf32>
    tpu.vector_store %arg7[%c0_16, %c0_17], %28 {strides = array<i32>} : memref<16x4xf32, #tpu.memory_space<vmem>>, vector<16x4xf32>,
    return
  }
  func.func @transform_0(%arg0: i32) -> (i32, i32) {
    %c0_i32 = arith.constant 0 : i32
    %c0_i32_0 = arith.constant 0 : i32
    return %arg0, %c0_i32 : i32, i32
  }
  func.func @transform_1(%arg0: i32) -> (i32, i32) {
    %c0_i32 = arith.constant 0 : i32
    %c0_i32_0 = arith.constant 0 : i32
    %c0_i32_1 = arith.constant 0 : i32
    return %c0_i32, %c0_i32_0 : i32, i32
  }
  func.func @transform_2(%arg0: i32) -> (i32, i32) {
    %c0_i32 = arith.constant 0 : i32
    %c0_i32_0 = arith.constant 0 : i32
    %c0_i32_1 = arith.constant 0 : i32
    return %c0_i32, %c0_i32_0 : i32, i32
  }
  func.func @transform_3(%arg0: i32) -> (i32, i32) {
    %c0_i32 = arith.constant 0 : i32
    %c0_i32_0 = arith.constant 0 : i32
    %c0_i32_1 = arith.constant 0 : i32
    return %c0_i32, %c0_i32_0 : i32, i32
  }
  func.func @transform_4(%arg0: i32) -> (i32, i32) {
    %c0_i32 = arith.constant 0 : i32
    %c0_i32_0 = arith.constant 0 : i32
    %c0_i32_1 = arith.constant 0 : i32
    return %c0_i32, %c0_i32_0 : i32, i32
  }
  func.func @transform_5(%arg0: i32) -> (i32, i32) {
    %c0_i32 = arith.constant 0 : i32
    %c0_i32_0 = arith.constant 0 : i32
    return %arg0, %c0_i32 : i32, i32
  }
  func.func @transform_6(%arg0: i32) -> (i32, i32) {
    %c0_i32 = arith.constant 0 : i32
    %c0_i32_0 = arith.constant 0 : i32
    return %arg0, %c0_i32 : i32, i32
  }
}

</mosaic_0001>

<llo_original>
// kernel: tpu_custom_call.1
$region0: #{tpu_custom_call.1}
  #allocation0 [shape = 'u32[]', space=smem, size = 0x4, offset = 0x4, fixed_abs, tag = 'smem constant byte address 0x4 - core index']
  #allocation1 [shape = 'u32[144,128]{1,0:T(1,128)}', space=vmem, size = 0x12000, scoped, tag = 'internal scratch']
  %s0 = inlined_call_operand.vmem [shape: f32[20,16], index: 0, kind: input, shape index: {}]
  %s1 = inlined_call_operand.vmem [shape: f32[16,32], index: 1, kind: input, shape index: {}]
  %s2 = inlined_call_operand.vmem [shape: f32[1,32], index: 2, kind: input, shape index: {}]
  %s3 = inlined_call_operand.vmem [shape: f32[32,128], index: 3, kind: input, shape index: {}]
  %s4 = inlined_call_operand.vmem [shape: f32[1,128], index: 4, kind: input, shape index: {}]
  %s5 = inlined_call_operand.vmem [shape: f32[20,4], index: 5, kind: input, shape index: {}]
  %s6 = inlined_call_operand.vmem [shape: f32[20,4], index: 6, kind: output, shape index: {}]
  %s7 = sld [smem:[#allocation0]]
  $region105: #{tpu_custom_call.1} parent=0
    _
  %s9 = ssub.s32 1, %s7
  %s10 = scalar_select 0, %s9, %s7
  $region1: #{tpu_custom_call.1} parent=0
    #allocation2 [shape = 'u8[16384]{0}', space=vmem, size = 0x4000, scoped, tag = 'output window, operand 0']
    loop: start=0, step=1, limit=4
    $region2: #{tpu_custom_call.1} parent=1 // loop_pre_header
      _
    $region3: #{tpu_custom_call.1} parent=1 // loop_header
      %s12 = sphi 0, %s16
      %p13 = scmp.ge.s32.totalorder %s12, 4
      %s22 = sphi 0, %s24
      %s25 = sphi 0, %s22
      %s26 = sphi 0, %s25
      %s42 = sphi 0, %s26
      %s46 = sphi 0, %s46
      %s48 = sphi 0, %s46
      %s49 = sphi 0, %s48
      %s63 = sphi 0, %s49
      %s67 = sphi 0, %s67
      %s69 = sphi 0, %s67
      %s70 = sphi 0, %s69
      %s84 = sphi 0, %s70
      %s88 = sphi 0, %s88
      %s90 = sphi 0, %s88
      %s91 = sphi 0, %s90
      %s105 = sphi 0, %s91
      %s109 = sphi 0, %s109
      %s111 = sphi 0, %s109
      %s112 = sphi 0, %s111
      %s126 = sphi 0, %s112
      %s132 = sphi 0, %s134
      %s135 = sphi 0, %s132
      %s136 = sphi 0, %s135
      %s152 = sphi 0, %s136
      %s158 = sphi 0, %s160
      %s161 = sphi 0, %s158
      %s162 = sphi 0, %s161
      %s178 = sphi 0, %s162
    $region4: #{tpu_custom_call.1} parent=1 // loop_header_branch
      %15 = sbr.rel (%p13) target = $region8
    $region5: #{tpu_custom_call.1} parent=1 // loop_body
      %s17 = ssub.s32 %s12, 1
      %s18 = ssub.s32 %s12, 2
      %s19 = sadd.s32 %s12, 1
      %s20 = ssub.s32 %s12, %s19
      %p21 = scmp.eq.s32.totalorder %s20, 0
      %s23 = sadd.s32 %s22, 1
      %s24 = scalar_select %p21, %s22, %s23
      %p27 = pneg %p21
      %p28 = scmp.eq.s32.totalorder %s12, 1
      %p29 = por %p27, %p28
      %p30 = scmp.ne.s32.totalorder %s22, %s25
      %p31 = scmp.eq.s32.totalorder %s12, 0
      %p32 = por %p30, %p31
      %p33 = scmp.ne.s32.totalorder %s22, %s25
      %p34 = scmp.eq.s32.totalorder %s17, 1
      %p35 = por %p33, %p34
      %p36 = scmp.ne.s32.totalorder %s25, %s26
      %p37 = scmp.eq.s32.totalorder %s17, 0
      %p38 = por %p36, %p37
      %p39 = scmp.ne.s32.totalorder %s25, %s26
      %p40 = scmp.eq.s32.totalorder %s18, 1
      %p41 = por %p39, %p40
      %p43 = scmp.ne.s32.totalorder %s26, %s42
      %p44 = scmp.eq.s32.totalorder %s18, 0
      %p45 = por %p43, %p44
      %s47 = sadd.s32 %s46, 1
      %p50 = scmp.eq.s32.totalorder %s12, 1
      %p51 = scmp.ne.s32.totalorder %s46, %s48
      %p52 = scmp.eq.s32.totalorder %s12, 0
      %p53 = por %p51, %p52
      %p54 = scmp.ne.s32.totalorder %s46, %s48
      %p55 = scmp.eq.s32.totalorder %s17, 1
      %p56 = por %p54, %p55
      %p57 = scmp.ne.s32.totalorder %s48, %s49
      %p58 = scmp.eq.s32.totalorder %s17, 0
      %p59 = por %p57, %p58
      %p60 = scmp.ne.s32.totalorder %s48, %s49
      %p61 = scmp.eq.s32.totalorder %s18, 1
      %p62 = por %p60, %p61
      %p64 = scmp.ne.s32.totalorder %s49, %s63
      %p65 = scmp.eq.s32.totalorder %s18, 0
      %p66 = por %p64, %p65
      %s68 = sadd.s32 %s67, 1
      %p71 = scmp.eq.s32.totalorder %s12, 1
      %p72 = scmp.ne.s32.totalorder %s67, %s69
      %p73 = scmp.eq.s32.totalorder %s12, 0
      %p74 = por %p72, %p73
      %p75 = scmp.ne.s32.totalorder %s67, %s69
      %p76 = scmp.eq.s32.totalorder %s17, 1
      %p77 = por %p75, %p76
      %p78 = scmp.ne.s32.totalorder %s69, %s70
      %p79 = scmp.eq.s32.totalorder %s17, 0
      %p80 = por %p78, %p79
      %p81 = scmp.ne.s32.totalorder %s69, %s70
      %p82 = scmp.eq.s32.totalorder %s18, 1
      %p83 = por %p81, %p82
      %p85 = scmp.ne.s32.totalorder %s70, %s84
      %p86 = scmp.eq.s32.totalorder %s18, 0
      %p87 = por %p85, %p86
      %s89 = sadd.s32 %s88, 1
      %p92 = scmp.eq.s32.totalorder %s12, 1
      %p93 = scmp.ne.s32.totalorder %s88, %s90
      %p94 = scmp.eq.s32.totalorder %s12, 0
      %p95 = por %p93, %p94
      %p96 = scmp.ne.s32.totalorder %s88, %s90
      %p97 = scmp.eq.s32.totalorder %s17, 1
      %p98 = por %p96, %p97
      %p99 = scmp.ne.s32.totalorder %s90, %s91
      %p100 = scmp.eq.s32.totalorder %s17, 0
      %p101 = por %p99, %p100
      %p102 = scmp.ne.s32.totalorder %s90, %s91
      %p103 = scmp.eq.s32.totalorder %s18, 1
      %p104 = por %p102, %p103
      %p106 = scmp.ne.s32.totalorder %s91, %s105
      %p107 = scmp.eq.s32.totalorder %s18, 0
      %p108 = por %p106, %p107
      %s110 = sadd.s32 %s109, 1
      %p113 = scmp.eq.s32.totalorder %s12, 1
      %p114 = scmp.ne.s32.totalorder %s109, %s111
      %p115 = scmp.eq.s32.totalorder %s12, 0
      %p116 = por %p114, %p115
      %p117 = scmp.ne.s32.totalorder %s109, %s111
      %p118 = scmp.eq.s32.totalorder %s17, 1
      %p119 = por %p117, %p118
      %p120 = scmp.ne.s32.totalorder %s111, %s112
      %p121 = scmp.eq.s32.totalorder %s17, 0
      %p122 = por %p120, %p121
      %p123 = scmp.ne.s32.totalorder %s111, %s112
      %p124 = scmp.eq.s32.totalorder %s18, 1
      %p125 = por %p123, %p124
      %p127 = scmp.ne.s32.totalorder %s112, %s126
      %p128 = scmp.eq.s32.totalorder %s18, 0
      %p129 = por %p127, %p128
      %s130 = ssub.s32 %s12, %s19
      %p131 = scmp.eq.s32.totalorder %s130, 0
      %s133 = sadd.s32 %s132, 1
      %s134 = scalar_select %p131, %s132, %s133
      %p137 = pneg %p131
      %p138 = scmp.eq.s32.totalorder %s12, 1
      %p139 = por %p137, %p138
      %p140 = scmp.ne.s32.totalorder %s132, %s135
      %p141 = scmp.eq.s32.totalorder %s12, 0
      %p142 = por %p140, %p141
      %p143 = scmp.ne.s32.totalorder %s132, %s135
      %p144 = scmp.eq.s32.totalorder %s17, 1
      %p145 = por %p143, %p144
      %p146 = scmp.ne.s32.totalorder %s135, %s136
      %p147 = scmp.eq.s32.totalorder %s17, 0
      %p148 = por %p146, %p147
      %p149 = scmp.ne.s32.totalorder %s135, %s136
      %p150 = scmp.eq.s32.totalorder %s18, 1
      %p151 = por %p149, %p150
      %p153 = scmp.ne.s32.totalorder %s136, %s152
      %p154 = scmp.eq.s32.totalorder %s18, 0
      %p155 = por %p153, %p154
      %s156 = ssub.s32 %s12, %s19
      %p157 = scmp.eq.s32.totalorder %s156, 0
      %s159 = sadd.s32 %s158, 1
      %s160 = scalar_select %p157, %s158, %s159
      %p163 = pneg %p157
      %p164 = scmp.eq.s32.totalorder %s12, 1
      %p165 = por %p163, %p164
      %p166 = scmp.ne.s32.totalorder %s158, %s161
      %p167 = scmp.eq.s32.totalorder %s12, 0
      %p168 = por %p166, %p167
      %p169 = scmp.ne.s32.totalorder %s158, %s161
      %p170 = scmp.eq.s32.totalorder %s17, 1
      %p171 = por %p169, %p170
      %p172 = scmp.ne.s32.totalorder %s161, %s162
      %p173 = scmp.eq.s32.totalorder %s17, 0
      %p174 = por %p172, %p173
      %p175 = scmp.ne.s32.totalorder %s161, %s162
      %p176 = scmp.eq.s32.totalorder %s18, 1
      %p177 = por %p175, %p176
      %p179 = scmp.ne.s32.totalorder %s162, %s178
      %p180 = scmp.eq.s32.totalorder %s18, 0
      %p181 = por %p179, %p180
      %p182 = scmp.le.s32.totalorder 1, %s12
      %p183 = scmp.lt.s32.totalorder %s12, 3
      %p184 = pnand %p182, %p183
      %p185 = pneg %p184
      // Predicated region
      $region9: #{tpu_custom_call.1} parent=5 // pred_check
        _
      $region10: #{tpu_custom_call.1} parent=5 // pred_check_branch
        %187 = sbr.rel (%p184) target = $region12
      $region11: #{tpu_custom_call.1} parent=5 // pred_region
        %s188 = ssub.s32 %s12, 1
        // Predicated region
        $region13: #{tpu_custom_call.1} parent=11 // pred_check
          %p189 = pneg %p59
        $region14: #{tpu_custom_call.1} parent=11 // pred_check_branch
          %191 = sbr.rel (%p189) target = $region16
        $region15: #{tpu_custom_call.1} parent=11 // pred_region
          _
        $region16: #{tpu_custom_call.1} parent=11 // pred_fallthru
          _
        // Predicated region
        $region17: #{tpu_custom_call.1} parent=11 // pred_check
          %p192 = pneg %p80
        $region18: #{tpu_custom_call.1} parent=11 // pred_check_branch
          %194 = sbr.rel (%p192) target = $region20
        $region19: #{tpu_custom_call.1} parent=11 // pred_region
          _
        $region20: #{tpu_custom_call.1} parent=11 // pred_fallthru
          _
        // Predicated region
        $region21: #{tpu_custom_call.1} parent=11 // pred_check
          %p195 = pneg %p101
        $region22: #{tpu_custom_call.1} parent=11 // pred_check_branch
          %197 = sbr.rel (%p195) target = $region24
        $region23: #{tpu_custom_call.1} parent=11 // pred_region
          _
        $region24: #{tpu_custom_call.1} parent=11 // pred_fallthru
          _
        // Predicated region
        $region25: #{tpu_custom_call.1} parent=11 // pred_check
          %p198 = pneg %p122
        $region26: #{tpu_custom_call.1} parent=11 // pred_check_branch
          %200 = sbr.rel (%p198) target = $region28
        $region27: #{tpu_custom_call.1} parent=11 // pred_region
          _
        $region28: #{tpu_custom_call.1} parent=11 // pred_fallthru
          _
      $region12: #{tpu_custom_call.1} parent=5 // pred_fallthru
        _
      %p201 = scmp.lt.s32.totalorder %s12, 2
      // Predicated region
      $region29: #{tpu_custom_call.1} parent=5 // pred_check
        %p202 = pneg %p201
      $region30: #{tpu_custom_call.1} parent=5 // pred_check_branch
        %204 = sbr.rel (%p202) target = $region32
      $region31: #{tpu_custom_call.1} parent=5 // pred_region
        // Predicated region
        $region33: #{tpu_custom_call.1} parent=31 // pred_check
          %p205 = pneg %p32
        $region34: #{tpu_custom_call.1} parent=31 // pred_check_branch
          %207 = sbr.rel (%p205) target = $region36
        $region35: #{tpu_custom_call.1} parent=31 // pred_region
          %s208 = smul.u32 2, %s12
          %s209 = ssub.s32 3, %s208
          %p210 = scmp.lt.s32.totalorder %s209, 2
          %s211 = scalar_select %p210, %s209, 2
          %s212 = smul.u32 128, %s211
          %p213 = scmp.lt.s32.totalorder %s208, 2
          %s214 = scalar_select %p213, %s208, 2
          %s215 = smul.addr %s214, 8
          %s216 = scalar_lea.vmem %s0, %s215
          %s217 = smul.u32 2, %s12
          %s218 = ssub.s32 3, %s217
          %p219 = scmp.lt.s32.totalorder %s218, 2
          %s220 = scalar_select %p219, %s218, 2
          %s221 = smul.u32 128, %s220
        $region36: #{tpu_custom_call.1} parent=31 // pred_fallthru
          _
        // Predicated region
        $region37: #{tpu_custom_call.1} parent=31 // pred_check
          %p222 = pneg %p142
        $region38: #{tpu_custom_call.1} parent=31 // pred_check_branch
          %224 = sbr.rel (%p222) target = $region40
        $region39: #{tpu_custom_call.1} parent=31 // pred_region
          %s225 = smul.u32 2, %s12
          %s226 = ssub.s32 3, %s225
          %p227 = scmp.lt.s32.totalorder %s226, 2
          %s228 = scalar_select %p227, %s226, 2
          %s229 = smul.u32 128, %s228
          %p230 = scmp.lt.s32.totalorder %s225, 2
          %s231 = scalar_select %p230, %s225, 2
          %s232 = smul.addr %s231, 8
          %s233 = scalar_lea.vmem %s5, %s232
          %s234 = smul.u32 2, %s12
          %s235 = ssub.s32 3, %s234
          %p236 = scmp.lt.s32.totalorder %s235, 2
          %s237 = scalar_select %p236, %s235, 2
          %s238 = smul.u32 128, %s237
        $region40: #{tpu_custom_call.1} parent=31 // pred_fallthru
          _
      $region32: #{tpu_custom_call.1} parent=5 // pred_fallthru
        _
      %p239 = scmp.le.s32.totalorder 1, %s12
      %p240 = scmp.lt.s32.totalorder %s12, 3
      %p241 = pnand %p239, %p240
      %p242 = pneg %p241
      // Predicated region
      $region41: #{tpu_custom_call.1} parent=5 // pred_check
        _
      $region42: #{tpu_custom_call.1} parent=5 // pred_check_branch
        %244 = sbr.rel (%p241) target = $region44
      $region43: #{tpu_custom_call.1} parent=5 // pred_region
        %s245 = ssub.s32 %s12, 1
        %s246 = smul.u32 2, %s17
        %s247 = ssub.s32 3, %s246
        %p248 = scmp.lt.s32.totalorder %s247, 2
        %s249 = scalar_select %p248, %s247, 2
        %s250 = smul.u32 128, %s249
        %p251 = scmp.lt.s32.totalorder %s246, 2
        %s252 = scalar_select %p251, %s246, 2
        %s253 = smul.addr %s252, 8
        %s254 = scalar_lea.vmem %s0, %s253
        %p255 = pneg %p38
        %p256 = pneg %p35
        %p257 = pneg %p59
        %p258 = pneg %p56
        %p259 = pneg %p80
        %p260 = pneg %p77
        %p261 = pneg %p101
        %p262 = pneg %p98
        %p263 = pneg %p122
        %p264 = pneg %p119
        %s265 = smul.u32 2, %s17
        %s266 = ssub.s32 3, %s265
        %p267 = scmp.lt.s32.totalorder %s266, 2
        %s268 = scalar_select %p267, %s266, 2
        %s269 = smul.u32 128, %s268
        %p270 = scmp.lt.s32.totalorder %s265, 2
        %s271 = scalar_select %p270, %s265, 2
        %s272 = smul.addr %s271, 8
        %s273 = scalar_lea.vmem %s5, %s272
        %p274 = pneg %p148
        %p275 = pneg %p145
        %p276 = pneg %p174
        %p277 = pneg %p171
        %s278 = sand.u32 %s161, 1
        %s279 = sand.u32 %s161, 1
        %s280 = smul.addr %s279, 16
        %s281 = scalar_lea.vmem [#allocation2], %s280
        %s282 = smul.u32 2, %s17
        %s283 = ssub.s32 3, %s282
        %p284 = scmp.lt.s32.totalorder %s283, 2
        %s285 = scalar_select %p284, %s283, 2
        %s286 = smul.u32 128, %s285
        %p287 = scmp.lt.s32.totalorder %s282, 2
        %s288 = scalar_select %p287, %s282, 2
        %s289 = smul.addr %s288, 8
        %s290 = scalar_lea.vmem %s0, %s289
        %s291 = smul.u32 2, %s17
        %s292 = ssub.s32 3, %s291
        %p293 = scmp.lt.s32.totalorder %s292, 2
        %s294 = scalar_select %p293, %s292, 2
        %s295 = smul.u32 128, %s294
        %s296 = smul.u32 2, %s17
        %s297 = ssub.s32 3, %s296
        %p298 = scmp.lt.s32.totalorder %s297, 2
        %s299 = scalar_select %p298, %s297, 2
        %s300 = smul.u32 128, %s299
        %p301 = scmp.lt.s32.totalorder %s296, 2
        %s302 = scalar_select %p301, %s296, 2
        %s303 = smul.addr %s302, 8
        %s304 = scalar_lea.vmem %s5, %s303
        %s305 = smul.u32 2, %s17
        %s306 = ssub.s32 3, %s305
        %p307 = scmp.lt.s32.totalorder %s306, 2
        %s308 = scalar_select %p307, %s306, 2
        %s309 = smul.u32 128, %s308
        %s310 = smul.u32 2, %s17
        %s311 = ssub.s32 3, %s310
        %p312 = scmp.lt.s32.totalorder %s311, 2
        %s313 = scalar_select %p312, %s311, 2
        %s314 = smul.u32 128, %s313
        %v315 = vld [vmem:[%s290] sm:$0xff]
        %v316 = vld [vmem:[%s290 + $0x8] sm:$0xff]
        %v317 = vld [vmem:[%s1] sm:$0xff]
        %v318 = vld [vmem:[%s1 + $0x8] sm:$0xff]
        %v319 = vld [vmem:[%s2] sm:$0x1]
        %v321 = vlaneseq
        %v322 = vshrl.u32 %v321, 7
        %v323 = vsub.s32 0, %v322
        %v324 = vrot.slane %v319, %v323
        %vm326 = vcmask 130048
        %v328 = vsel %vm326, %v315, 0
        %v331 = vsel %vm326, %v316, 0
        %333 = vmatprep.subr.mxu0 0.0
        %334 = vmatpush1.msra.mxu0 %v317
        %335 = vmatprep.subr.mxu0 0.0
        %336 = vmatpush1.msra.mxu0 %v318
        %337 = vmatprep.subr.mxu0 0.0
        %338 = vmatpush1.msra.mxu0 0.0
        %339 = vmatprep.subr.mxu0 0.0
        %340 = vmatpush1.msra.mxu0 0.0
        %341 = vmatprep.subr.mxu0 0.0
        %342 = vmatpush1.msra.mxu0 0.0
        %343 = vmatprep.subr.mxu0 0.0
        %344 = vmatpush1.msra.mxu0 0.0
        %345 = vmatprep.subr.mxu0 0.0
        %346 = vmatpush1.msra.mxu0 0.0
        %347 = vmatprep.subr.mxu0 0.0
        %348 = vmatpush1.msra.mxu0 0.0
        %349 = vmatprep.subr.mxu0 0.0
        %350 = vmatpush1.msra.mxu0 0.0
        %351 = vmatprep.subr.mxu0 0.0
        %352 = vmatpush1.msra.mxu0 0.0
        %353 = vmatprep.subr.mxu0 0.0
        %354 = vmatpush1.msra.mxu0 0.0
        %355 = vmatprep.subr.mxu0 0.0
        %356 = vmatpush1.msra.mxu0 0.0
        %357 = vmatprep.subr.mxu0 0.0
        %358 = vmatpush1.msra.mxu0 0.0
        %359 = vmatprep.subr.mxu0 0.0
        %360 = vmatpush1.msra.mxu0 0.0
        %361 = vmatprep.subr.mxu0 0.0
        %362 = vmatpush1.msra.mxu0 0.0
        %363 = vmatprep.subr.mxu0 0.0
        %364 = vmatpush1.msra.mxu0 0.0
        %365 = vmatprep.subr.mxu0 0.0
        %366 = vmatpush1.msra.mxu0 0.0
        %367 = vmatprep.subr.mxu0 0.0
        %368 = vmatpush1.msra.mxu0 0.0
        %369 = vmatprep.subr.mxu0 0.0
        %370 = vmatpush1.msra.mxu0 0.0
        %371 = vmatprep.subr.mxu0 0.0
        %372 = vmatpush1.msra.mxu0 0.0
        %373 = vmatprep.subr.mxu0 0.0
        %374 = vmatpush1.msra.mxu0 0.0
        %375 = vmatprep.subr.mxu0 0.0
        %376 = vmatpush1.msra.mxu0 0.0
        %377 = vmatprep.subr.mxu0 0.0
        %378 = vmatpush1.msra.mxu0 0.0
        %379 = vmatprep.subr.mxu0 0.0
        %380 = vmatpush1.msra.mxu0 0.0
        %381 = vmatprep.subr.mxu0 0.0
        %382 = vmatpush1.msra.mxu0 0.0
        %383 = vmatprep.subr.mxu0 0.0
        %384 = vmatpush1.msra.mxu0 0.0
        %385 = vmatprep.subr.mxu0 0.0
        %386 = vmatpush1.msra.mxu0 0.0
        %387 = vmatprep.subr.mxu0 0.0
        %388 = vmatpush1.msra.mxu0 0.0
        %389 = vmatprep.subr.mxu0 0.0
        %390 = vmatpush1.msra.mxu0 0.0
        %391 = vmatprep.subr.mxu0 0.0
        %392 = vmatpush1.msra.mxu0 0.0
        %393 = vmatprep.subr.mxu0 0.0
        %394 = vmatpush1.msra.mxu0 0.0
        %395 = vmatprep.subr.mxu0 0.0
        %396 = vmatpush1.msra.mxu0 0.0
        %397 = vmatprep.mubr.f32.mxu0 0.0
        %398 = vmatmul.mubr.f32.gmra.mrb[0].mxu0 %v328
        %v399 = vpop.f32.mrb[0].mxu0
        %v400 = vadd.f32 %v324, %v399
        %v401 = vpop.f32.mrb[0].mxu0
        %402 = vmatprep.mubr.f32.mxu0 0.0
        %403 = vmatmul.mubr.f32.gmra.mrb[0].mxu0 %v331
        %v404 = vpop.f32.mrb[0].mxu0
        %v405 = vadd.f32 %v324, %v404
        %v406 = vpop.f32.mrb[0].mxu0
        %407 = vdwg.mxu0
        %v408 = vmax.f32 %v400, 0.0
        %v409 = vmax.f32 %v405, 0.0
        %v410 = vld [vmem:[%s3] sm:$0xff]
        %v411 = vld [vmem:[%s3 + $0x8] sm:$0xff]
        %v412 = vld [vmem:[%s3 + $0x10] sm:$0xff]
        %v413 = vld [vmem:[%s3 + $0x18] sm:$0xff]
        %v414 = vld [vmem:[%s4] sm:$0x1]
        %v416 = vlaneseq
        %v417 = vshrl.u32 %v416, 7
        %v418 = vsub.s32 0, %v417
        %v419 = vrot.slane %v414, %v418
        %vm421 = vcmask 261120
        %v423 = vsel %vm421, %v408, 0
        %v426 = vsel %vm421, %v409, 0
        %428 = vmatprep.subr.mxu0 0.0
        %429 = vmatpush1.msra.mxu0 %v410
        %430 = vmatprep.subr.mxu0 0.0
        %431 = vmatpush1.msra.mxu0 %v411
        %432 = vmatprep.subr.mxu0 0.0
        %433 = vmatpush1.msra.mxu0 %v412
        %434 = vmatprep.subr.mxu0 0.0
        %435 = vmatpush1.msra.mxu0 %v413
        %436 = vmatprep.subr.mxu0 0.0
        %437 = vmatpush1.msra.mxu0 0.0
        %438 = vmatprep.subr.mxu0 0.0
        %439 = vmatpush1.msra.mxu0 0.0
        %440 = vmatprep.subr.mxu0 0.0
        %441 = vmatpush1.msra.mxu0 0.0
        %442 = vmatprep.subr.mxu0 0.0
        %443 = vmatpush1.msra.mxu0 0.0
        %444 = vmatprep.subr.mxu0 0.0
        %445 = vmatpush1.msra.mxu0 0.0
        %446 = vmatprep.subr.mxu0 0.0
        %447 = vmatpush1.msra.mxu0 0.0
        %448 = vmatprep.subr.mxu0 0.0
        %449 = vmatpush1.msra.mxu0 0.0
        %450 = vmatprep.subr.mxu0 0.0
        %451 = vmatpush1.msra.mxu0 0.0
        %452 = vmatprep.subr.mxu0 0.0
        %453 = vmatpush1.msra.mxu0 0.0
        %454 = vmatprep.subr.mxu0 0.0
        %455 = vmatpush1.msra.mxu0 0.0
        %456 = vmatprep.subr.mxu0 0.0
        %457 = vmatpush1.msra.mxu0 0.0
        %458 = vmatprep.subr.mxu0 0.0
        %459 = vmatpush1.msra.mxu0 0.0
        %460 = vmatprep.subr.mxu0 0.0
        %461 = vmatpush1.msra.mxu0 0.0
        %462 = vmatprep.subr.mxu0 0.0
        %463 = vmatpush1.msra.mxu0 0.0
        %464 = vmatprep.subr.mxu0 0.0
        %465 = vmatpush1.msra.mxu0 0.0
        %466 = vmatprep.subr.mxu0 0.0
        %467 = vmatpush1.msra.mxu0 0.0
        %468 = vmatprep.subr.mxu0 0.0
        %469 = vmatpush1.msra.mxu0 0.0
        %470 = vmatprep.subr.mxu0 0.0
        %471 = vmatpush1.msra.mxu0 0.0
        %472 = vmatprep.subr.mxu0 0.0
        %473 = vmatpush1.msra.mxu0 0.0
        %474 = vmatprep.subr.mxu0 0.0
        %475 = vmatpush1.msra.mxu0 0.0
        %476 = vmatprep.subr.mxu0 0.0
        %477 = vmatpush1.msra.mxu0 0.0
        %478 = vmatprep.subr.mxu0 0.0
        %479 = vmatpush1.msra.mxu0 0.0
        %480 = vmatprep.subr.mxu0 0.0
        %481 = vmatpush1.msra.mxu0 0.0
        %482 = vmatprep.subr.mxu0 0.0
        %483 = vmatpush1.msra.mxu0 0.0
        %484 = vmatprep.subr.mxu0 0.0
        %485 = vmatpush1.msra.mxu0 0.0
        %486 = vmatprep.subr.mxu0 0.0
        %487 = vmatpush1.msra.mxu0 0.0
        %488 = vmatprep.subr.mxu0 0.0
        %489 = vmatpush1.msra.mxu0 0.0
        %490 = vmatprep.subr.mxu0 0.0
        %491 = vmatpush1.msra.mxu0 0.0
        %492 = vmatprep.mubr.f32.mxu0 0.0
        %493 = vmatmul.mubr.f32.gmra.mrb[0].mxu0 %v423
        %v494 = vpop.f32.mrb[0].mxu0
        %v495 = vadd.f32 %v419, %v494
        %v496 = vpop.f32.mrb[0].mxu0
        %497 = vmatprep.mubr.f32.mxu0 0.0
        %498 = vmatmul.mubr.f32.gmra.mrb[0].mxu0 %v426
        %v499 = vpop.f32.mrb[0].mxu0
        %v500 = vadd.f32 %v419, %v499
        %v501 = vpop.f32.mrb[0].mxu0
        %502 = vdwg.mxu0
        %v503 = vand.u32 2147483647, %v495
        %v504 = vand.u32 2147483647, %v500
        %v505 = vsub.f32 0.0, %v503
        %v506 = vsub.f32 0.0, %v504
        %v507 = vmul.f32 %v505, 1.442695
        %v508 = vpow.pop %v507
        %v509 = vmul.f32 %v506, 1.442695
        %v510 = vpow.pop %v509
        %v511 = vadd.f32 %v508, 1.0
        %v512 = vlog2.pop %v511
        %v513 = vmul.f32 %v512, 0.6931472
        %v514 = vmul.f32 -0.5, %v508
        %v515 = vadd.f32 %v514, 1.0
        %v516 = vmul.f32 %v515, %v508
        %v517 = vand.u32 2147483647, %v508
        %vm518 = vcmp.lt.f32.partialorder %v517, 0.0004427343
        %v519 = vsel %vm518, %v516, %v513
        %v520 = vadd.f32 %v510, 1.0
        %v521 = vlog2.pop %v520
        %v522 = vmul.f32 %v521, 0.6931472
        %v523 = vmul.f32 -0.5, %v510
        %v524 = vadd.f32 %v523, 1.0
        %v525 = vmul.f32 %v524, %v510
        %v526 = vand.u32 2147483647, %v510
        %vm527 = vcmp.lt.f32.partialorder %v526, 0.0004427343
        %v528 = vsel %vm527, %v525, %v522
        %v529 = vmax.f32 %v495, 0.0
        %v530 = vmax.f32 %v500, 0.0
        %v531 = vadd.f32 %v519, %v529
        %v532 = vadd.f32 %v528, %v530
        %v533 = vld [vmem:[%s304] sm:$0xff]
        %v534 = vld [vmem:[%s304 + $0x8] sm:$0xff]
        %537 = vrot.lane.b32.xlu0 %v533, 64
        %v538 = vpop.permute.xlu0 %537
        %539 = vrot.lane.b32.xlu0 %v534, 64
        %v540 = vpop.permute.xlu0 %539
        %v543 = vmul.f32 %v531, %v538
        %v544 = vmul.f32 %v532, %v540
        %547 = vrot.lane.b32.xlu0 %v543, 64
        %v548 = vpop.permute.xlu0 %547
        %549 = vrot.lane.b32.xlu0 %v544, 64
        %v550 = vpop.permute.xlu0 %549
        %v553 = vadd.f32 %v495, %v548
        %v554 = vadd.f32 %v500, %v550
        %v555 = vtanh.pop %v553
        %v556 = vtanh.pop %v554
        %v557 = vmul.f32 %v555, 2.0
        %v558 = vmul.f32 %v556, 2.0
        %vm559 = vcmask 31744
        %560 = vst.msk [vmem:[%s281] sm:$0xff] %vm559, %v557
        %561 = vst.msk [vmem:[%s281 + $0x8] sm:$0xff] %vm559, %v558
        %s562 = sand.u32 %s161, 1
        %s563 = sand.u32 %s161, 1
        %s564 = smul.addr %s563, 16
        %s565 = scalar_lea.vmem [#allocation2], %s564
        // Predicated region
        $region45: #{tpu_custom_call.1} parent=43 // pred_check
          %p566 = pneg %p171
        $region46: #{tpu_custom_call.1} parent=43 // pred_check_branch
          %568 = sbr.rel (%p566) target = $region48
        $region47: #{tpu_custom_call.1} parent=43 // pred_region
          %s569 = smul.u32 2, %s17
          %s570 = ssub.s32 3, %s569
          %p571 = scmp.lt.s32.totalorder %s570, 2
          %s572 = scalar_select %p571, %s570, 2
          %s573 = smul.u32 128, %s572
          %p574 = scmp.ne.s32.totalorder 0, %s573
          %s575 = smul.addr %s569, 8
          %s576 = scalar_lea.vmem %s6, %s575
          // Predicated region
          $region49: #{tpu_custom_call.1} parent=47 // pred_check
            %p577 = pneg %p574
          $region50: #{tpu_custom_call.1} parent=47 // pred_check_branch
            %579 = sbr.rel (%p577) target = $region52
          $region51: #{tpu_custom_call.1} parent=47 // pred_region
            // Predicated region
            $region53: #{tpu_custom_call.1} parent=51 // pred_check
              _
            $region54: #{tpu_custom_call.1} parent=51 // pred_check_branch
              %581 = sbr.rel (0) target = $region56
            $region55: #{tpu_custom_call.1} parent=51 // pred_region
              // Predicated region
              $region75: #{tpu_custom_call.1} parent=55 // pred_check
                _
              $region76: #{tpu_custom_call.1} parent=55 // pred_check_branch
                %632 = sbr.rel (0) target = $region78
              $region77: #{tpu_custom_call.1} parent=55 // pred_region
                %s633 = sshrl.u32 %s572, 1
                // While loop
                $region79: #{tpu_custom_call.1} parent=77 // loop_pre_header
                  _
                $region80: #{tpu_custom_call.1} parent=77 // loop_header
                  %s635 = sphi 0, %s637
                  %p636 = scmp.ge.s32.totalorder %s635, %s633
                  %s640 = sphi 0, %s649
                  %s641 = sphi %s565, %s652
                  %s642 = sphi %s576, %s653
                $region81: #{tpu_custom_call.1} parent=77 // loop_header_branch
                  %639 = sbr.rel (%p636) target = $region85
                $region82: #{tpu_custom_call.1} parent=77 // loop_body
                  %v643 = vld [vmem:[%s641] sm:$0xff]
                  %644 = vst [vmem:[%s642] sm:$0xff] %v643
                  %v645 = vld [vmem:[%s641 + $0x8] sm:$0xff]
                  %646 = vst [vmem:[%s642 + $0x8] sm:$0xff] %v645
                  %s647 = sadd.s32 1, %s640
                  %p648 = scmp.ge.s32.totalorder %s647, %s633
                  %s649 = scalar_select %p648, 0, %s647
                  %s650 = smul.u32 %s649, 16
                  %s651 = smul.u32 %s649, 16
                  %s652 = scalar_lea.vmem %s565, %s650 [#allocation2]
                  %s653 = scalar_lea.vmem %s576, %s651
                $region83: #{tpu_custom_call.1} parent=77 // loop_footer
                  %s637 = sadd.s32 %s635, 1
                $region84: #{tpu_custom_call.1} parent=77 // loop_footer_branch
                  %634 = sbr.rel target = $region80
                $region85: #{tpu_custom_call.1} parent=77 // loop_exit
                  _
                %s654 = sshrl.u32 %s572, 1
                %s655 = sand.u32 %s572, 1
                %s656 = smul.u32 %s654, 2
                %s657 = smul.u32 8, %s656
                %s658 = scalar_lea.vmem %s565, %s657 [#allocation2]
                %s659 = smul.u32 8, %s656
                %s660 = scalar_lea.vmem %s576, %s659
                // While loop
                $region86: #{tpu_custom_call.1} parent=77 // loop_pre_header
                  _
                $region87: #{tpu_custom_call.1} parent=77 // loop_header
                  %s662 = sphi 0, %s664
                  %p663 = scmp.ge.s32.totalorder %s662, %s655
                  %s667 = sphi 0, %s674
                  %s668 = sphi %s658, %s677
                  %s669 = sphi %s660, %s678
                $region88: #{tpu_custom_call.1} parent=77 // loop_header_branch
                  %666 = sbr.rel (%p663) target = $region92
                $region89: #{tpu_custom_call.1} parent=77 // loop_body
                  %v670 = vld [vmem:[%s668] sm:$0xff]
                  %671 = vst [vmem:[%s669] sm:$0xff] %v670
                  %s672 = sadd.s32 1, %s667
                  %p673 = scmp.ge.s32.totalorder %s672, %s655
                  %s674 = scalar_select %p673, 0, %s672
                  %s675 = smul.u32 %s674, 8
                  %s676 = smul.u32 %s674, 8
                  %s677 = scalar_lea.vmem %s658, %s675 [#allocation2]
                  %s678 = scalar_lea.vmem %s660, %s676
                $region90: #{tpu_custom_call.1} parent=77 // loop_footer
                  %s664 = sadd.s32 %s662, 1
                $region91: #{tpu_custom_call.1} parent=77 // loop_footer_branch
                  %661 = sbr.rel target = $region87
                $region92: #{tpu_custom_call.1} parent=77 // loop_exit
                  _
              $region78: #{tpu_custom_call.1} parent=55 // pred_fallthru
                _
              // Predicated region
              $region93: #{tpu_custom_call.1} parent=55 // pred_check
                _
              $region94: #{tpu_custom_call.1} parent=55 // pred_check_branch
                %680 = sbr.rel target = $region96
              $region95: #{tpu_custom_call.1} parent=55 // pred_region
                _
              $region96: #{tpu_custom_call.1} parent=55 // pred_fallthru
                _
            $region56: #{tpu_custom_call.1} parent=51 // pred_fallthru
              _
            // Predicated region
            $region57: #{tpu_custom_call.1} parent=51 // pred_check
              _
            $region58: #{tpu_custom_call.1} parent=51 // pred_check_branch
              %583 = sbr.rel target = $region60
            $region59: #{tpu_custom_call.1} parent=51 // pred_region
              %s585 = sshrl.u32 %s572, 1
              // While loop
              $region61: #{tpu_custom_call.1} parent=59 // loop_pre_header
                _
              $region62: #{tpu_custom_call.1} parent=59 // loop_header
                %s587 = sphi 0, %s589
                %p588 = scmp.ge.s32.totalorder %s587, %s585
                %s592 = sphi 0, %s601
                %s593 = sphi %s565, %s604
                %s594 = sphi %s576, %s605
              $region63: #{tpu_custom_call.1} parent=59 // loop_header_branch
                %591 = sbr.rel (%p588) target = $region67
              $region64: #{tpu_custom_call.1} parent=59 // loop_body
                %v595 = vld [vmem:[%s593] sm:$0xff]
                %596 = vst [vmem:[%s594] sm:$0xff] %v595
                %v597 = vld [vmem:[%s593 + $0x8] sm:$0xff]
                %598 = vst [vmem:[%s594 + $0x8] sm:$0xff] %v597
                %s599 = sadd.s32 1, %s592
                %p600 = scmp.ge.s32.totalorder %s599, %s585
                %s601 = scalar_select %p600, 0, %s599
                %s602 = smul.u32 %s601, 16
                %s603 = smul.u32 %s601, 16
                %s604 = scalar_lea.vmem %s565, %s602 [#allocation2]
                %s605 = scalar_lea.vmem %s576, %s603
              $region65: #{tpu_custom_call.1} parent=59 // loop_footer
                %s589 = sadd.s32 %s587, 1
              $region66: #{tpu_custom_call.1} parent=59 // loop_footer_branch
                %586 = sbr.rel target = $region62
              $region67: #{tpu_custom_call.1} parent=59 // loop_exit
                _
              %s606 = sshrl.u32 %s572, 1
              %s607 = sand.u32 %s572, 1
              %s608 = smul.u32 %s606, 2
              %s609 = smul.u32 8, %s608
              %s610 = scalar_lea.vmem %s565, %s609 [#allocation2]
              %s611 = smul.u32 8, %s608
              %s612 = scalar_lea.vmem %s576, %s611
              // While loop
              $region68: #{tpu_custom_call.1} parent=59 // loop_pre_header
                _
              $region69: #{tpu_custom_call.1} parent=59 // loop_header
                %s614 = sphi 0, %s616
                %p615 = scmp.ge.s32.totalorder %s614, %s607
                %s619 = sphi 0, %s626
                %s620 = sphi %s610, %s629
                %s621 = sphi %s612, %s630
              $region70: #{tpu_custom_call.1} parent=59 // loop_header_branch
                %618 = sbr.rel (%p615) target = $region74
              $region71: #{tpu_custom_call.1} parent=59 // loop_body
                %v622 = vld [vmem:[%s620] sm:$0xff]
                %623 = vst [vmem:[%s621] sm:$0xff] %v622
                %s624 = sadd.s32 1, %s619
                %p625 = scmp.ge.s32.totalorder %s624, %s607
                %s626 = scalar_select %p625, 0, %s624
                %s627 = smul.u32 %s626, 8
                %s628 = smul.u32 %s626, 8
                %s629 = scalar_lea.vmem %s610, %s627 [#allocation2]
                %s630 = scalar_lea.vmem %s612, %s628
              $region72: #{tpu_custom_call.1} parent=59 // loop_footer
                %s616 = sadd.s32 %s614, 1
              $region73: #{tpu_custom_call.1} parent=59 // loop_footer_branch
                %613 = sbr.rel target = $region69
              $region74: #{tpu_custom_call.1} parent=59 // loop_exit
                _
            $region60: #{tpu_custom_call.1} parent=51 // pred_fallthru
              _
          $region52: #{tpu_custom_call.1} parent=47 // pred_fallthru
            _
          %681 = vnop
        $region48: #{tpu_custom_call.1} parent=43 // pred_fallthru
          _
      $region44: #{tpu_custom_call.1} parent=5 // pred_fallthru
        _
      %p682 = scmp.le.s32.totalorder 2, %s12
      // Predicated region
      $region97: #{tpu_custom_call.1} parent=5 // pred_check
        %p683 = pneg %p682
      $region98: #{tpu_custom_call.1} parent=5 // pred_check_branch
        %685 = sbr.rel (%p683) target = $region100
      $region99: #{tpu_custom_call.1} parent=5 // pred_region
        %s686 = ssub.s32 %s12, 2
        // Predicated region
        $region101: #{tpu_custom_call.1} parent=99 // pred_check
          %p687 = pneg %p177
        $region102: #{tpu_custom_call.1} parent=99 // pred_check_branch
          %689 = sbr.rel (%p687) target = $region104
        $region103: #{tpu_custom_call.1} parent=99 // pred_region
          %s690 = sand.u32 %s162, 1
          %s691 = sand.u32 %s162, 1
          %s692 = smul.addr %s691, 16
          %s693 = scalar_lea.vmem [#allocation2], %s692
        $region104: #{tpu_custom_call.1} parent=99 // pred_fallthru
          _
      $region100: #{tpu_custom_call.1} parent=5 // pred_fallthru
        _
    $region6: #{tpu_custom_call.1} parent=1 // loop_footer
      %s16 = sadd.s32 1, %s12
    $region7: #{tpu_custom_call.1} parent=1 // loop_footer_branch
      %11 = sbr.rel target = $region3
    $region8: #{tpu_custom_call.1} parent=1 // loop_exit
      _

</llo_original>
